<compile_context>
chip_gen: v7x
topology: tpu7x:2x2x1
jax: 0.10.0
libtpu: 0.0.40
codegen_flags: <defaults>
</compile_context>

<pallas_src>
import functools

import jax
import jax.numpy as jnp
from jax.experimental import pallas as pl
from jax.experimental.pallas import tpu as pltpu


def _ensemble_kernel(num_critics, action_dim,
                     lam_ref,
                     x_ref, w1_ref, b1_ref, w2_ref, b2_ref, w3_ref, b3_ref,
                     out_ref):
    """One batch tile: 3 packed/block-diagonal matmuls + min/max epilogue."""
    lam = lam_ref[0]                                         # SMEM scalar read
    x = x_ref[...]                                           # (TB, D)

    # Layer 1: all critics fused on the N axis -> (TB, E*H1)
    h1 = jnp.dot(x, w1_ref[...], preferred_element_type=jnp.float32)
    h1 = jnp.maximum(h1 + b1_ref[...], 0.0)

    # Layer 2: block-diagonal -> (TB, E*H2); zero off-blocks keep critics independent.
    h2 = jnp.dot(h1, w2_ref[...], preferred_element_type=jnp.float32)
    h2 = jnp.maximum(h2 + b2_ref[...], 0.0)

    # Layer 3: block-diagonal -> (TB, E*A); Identity out_act.
    v = jnp.dot(h2, w3_ref[...], preferred_element_type=jnp.float32) + b3_ref[...]

    # min/max over the E lane-groups of width A (static unrolled: E*A = 20 lanes).
    vmin = v[:, 0:action_dim]
    vmax = vmin
    for e in range(1, num_critics):
        ve = v[:, e * action_dim:(e + 1) * action_dim]
        vmin = jnp.minimum(vmin, ve)
        vmax = jnp.maximum(vmax, ve)

    # lam*min + (1-lam)*max  ==  max + lam*(min - max)
    out_ref[...] = (vmax + lam * (vmin - vmax)).astype(out_ref.dtype)


def _block_diag(stacked):
    """(E, In, Out) per-critic weights -> (E*In, E*Out) block-diagonal matrix."""
    E, din, dout = stacked.shape
    eye = jnp.eye(E, dtype=stacked.dtype)
    return jnp.einsum("eij,ef->eifj", stacked, eye).reshape(E * din, E * dout)


def pack_params(params):
    """Build ensemble-packed / block-diagonal weights from stacked per-critic params.

    In production call this once at init; here it is cheap enough to do per call.
    """
    w1, b1 = params["w1"], params["b1"]   # (E, D,  H1), (E, 1, H1)
    w2, b2 = params["w2"], params["b2"]   # (E, H1, H2), (E, 1, H2)
    w3, b3 = params["w3"], params["b3"]   # (E, H2, A),  (E, 1, A)
    E, D, H1 = w1.shape
    _, _, H2 = w2.shape
    _, _, A = w3.shape
    return {
        "w1": jnp.transpose(w1, (1, 0, 2)).reshape(D, E * H1),   # (D, E*H1)
        "b1": b1.reshape(1, E * H1),
        "w2": _block_diag(w2),                                    # (E*H1, E*H2)
        "b2": b2.reshape(1, E * H2),
        "w3": _block_diag(w3),                                    # (E*H2, E*A)
        "b3": b3.reshape(1, E * A),
        "dims": (E, D, H1, H2, A),
    }


def _round_up(x, m):
    return ((x + m - 1) // m) * m


def ensemble_forward(state, params, lam=0.9, tile_b=1024):
    """state: (B, state_dim) f32.  params: dict of stacked per-critic weights."""
    packed = pack_params(params)
    E, D, H1, H2, A = packed["dims"]
    B = state.shape[0]

    # Big tiles amortize per-grid-step overhead; on v7x (2 TCs) make sure the
    # batch still splits into >= 4 "parallel" tiles when it is big enough.
    tile_b = min(tile_b, B)
    if B >= 32:
        tile_b = min(tile_b, _round_up(pl.cdiv(B, 4), 8))
    tile_b = max(tile_b, 1)
    grid_b = pl.cdiv(B, tile_b)

    lam_arr = jnp.asarray([lam], dtype=jnp.float32)          # runtime scalar via SMEM

    kernel = functools.partial(_ensemble_kernel, E, A)

    def resident(shape):                                     # weights: resident, no re-DMA
        return pl.BlockSpec(shape, lambda i: (0, 0))

    return pl.pallas_call(
        kernel,
        out_shape=jax.ShapeDtypeStruct((B, A), jnp.float32),
        grid_spec=pltpu.PrefetchScalarGridSpec(
            num_scalar_prefetch=0,
            grid=(grid_b,),
            in_specs=[
                pl.BlockSpec(memory_space=pltpu.MemorySpace.SMEM),  # lam (1,) f32
                pl.BlockSpec((tile_b, D), lambda i: (i, 0)),        # state tile
                resident((D, E * H1)),                              # W1 packed
                resident((1, E * H1)),                              # b1 packed
                resident((E * H1, E * H2)),                         # W2 block-diag
                resident((1, E * H2)),                              # b2 packed
                resident((E * H2, E * A)),                          # W3 block-diag
                resident((1, E * A)),                               # b3 packed
            ],
            out_specs=pl.BlockSpec((tile_b, A), lambda i: (i, 0)),
        ),
        compiler_params=pltpu.CompilerParams(
            dimension_semantics=("parallel",),   # batch tiles shard across TCs (v7x)
        ),
    )(lam_arr, state, packed["w1"], packed["b1"],
      packed["w2"], packed["b2"], packed["w3"], packed["b3"])


def init_params(key, state_dim, action_dim, num_neurons, num_critics):
    """Deterministic synthetic parameters (PyTorch nn.Linear-style uniform init)."""
    dims = [state_dim] + list(num_neurons) + [action_dim]
    params = {}
    for li in range(len(dims) - 1):
        in_d, out_d = dims[li], dims[li + 1]
        key, kw, kb = jax.random.split(key, 3)
        bound = 1.0 / jnp.sqrt(in_d)
        w = jax.random.uniform(kw, (num_critics, in_d, out_d),
                               minval=-bound, maxval=bound, dtype=jnp.float32)
        b = jax.random.uniform(kb, (num_critics, 1, out_d),
                               minval=-bound, maxval=bound, dtype=jnp.float32)
        params[f"w{li + 1}"] = w
        params[f"b{li + 1}"] = b
    return params


def reference_forward(state, params, lam=0.9):
    """Pure-JAX reference for correctness checking."""
    def one_critic(w1, b1, w2, b2, w3, b3):
        h1 = jnp.maximum(state @ w1 + b1, 0.0)
        h2 = jnp.maximum(h1 @ w2 + b2, 0.0)
        return h2 @ w3 + b3
    vals = jax.vmap(one_critic)(params["w1"], params["b1"],
                                params["w2"], params["b2"],
                                params["w3"], params["b3"])   # (E, B, A)
    return lam * jnp.min(vals, axis=0) + (1.0 - lam) * jnp.max(vals, axis=0)


if __name__ == "__main__":
    # Small shapes consistent with the module.
    B = 8            # batch
    STATE_DIM = 16
    ACTION_DIM = 4
    NUM_NEURONS = [64, 32]
    NUM_CRITICS = 5
    LAM = 0.9

    key = jax.random.PRNGKey(0)
    key, ks = jax.random.split(key)
    state = jax.random.normal(ks, (B, STATE_DIM), dtype=jnp.float32)
    params = init_params(key, STATE_DIM, ACTION_DIM, NUM_NEURONS, NUM_CRITICS)

    # Single-tile path (small batch).
    out = ensemble_forward(state, params, lam=LAM)
    out = jax.block_until_ready(out)
    ref = reference_forward(state, params, lam=LAM)
    assert out.shape == (B, ACTION_DIM)
    assert jnp.allclose(out, ref, atol=1e-5, rtol=1e-5), "mismatch vs reference (B=8)"

    # Multi-tile path (grid > 1, exercises the parallel batch axis).
    B2 = 256
    key, ks2 = jax.random.split(key)
    state2 = jax.random.normal(ks2, (B2, STATE_DIM), dtype=jnp.float32)
    out2 = jax.block_until_ready(ensemble_forward(state2, params, lam=LAM))
    ref2 = reference_forward(state2, params, lam=LAM)
    assert out2.shape == (B2, ACTION_DIM)
    assert jnp.allclose(out2, ref2, atol=1e-5, rtol=1e-5), "mismatch vs reference (B=256)"

    print("KERNEL_OK")
</pallas_src>

<mosaic_0001>
module attributes {stable_mosaic.version = 11 : i64} {
  func.func @_ensemble_kernel(%arg0: i32, %arg1: memref<1xf32, #tpu.memory_space<smem>>, %arg2: memref<8x16xf32, #tpu.memory_space<vmem>>, %arg3: memref<16x320xf32, #tpu.memory_space<vmem>>, %arg4: memref<1x320xf32, #tpu.memory_space<vmem>>, %arg5: memref<320x160xf32, #tpu.memory_space<vmem>>, %arg6: memref<1x160xf32, #tpu.memory_space<vmem>>, %arg7: memref<160x20xf32, #tpu.memory_space<vmem>>, %arg8: memref<1x20xf32, #tpu.memory_space<vmem>>, %arg9: memref<8x4xf32, #tpu.memory_space<vmem>>) attributes {dimension_semantics = [#tpu.dimension_semantics<parallel>], iteration_bounds = array<i64: 1>, scalar_prefetch = 0 : i64, scratch_operands = 0 : i64, tpu.core_type = #tpu.core_type<tc>, window_params = [{transform_indices = @transform_0, window_bounds = array<i64: 1>}, {transform_indices = @transform_1, window_bounds = array<i64: 8, 16>}, {pipeline_mode = #tpu.pipeline_mode<synchronous>, transform_indices = @transform_2, window_bounds = array<i64: 16, 320>}, {pipeline_mode = #tpu.pipeline_mode<synchronous>, transform_indices = @transform_3, window_bounds = array<i64: 1, 320>}, {pipeline_mode = #tpu.pipeline_mode<synchronous>, transform_indices = @transform_4, window_bounds = array<i64: 320, 160>}, {pipeline_mode = #tpu.pipeline_mode<synchronous>, transform_indices = @transform_5, window_bounds = array<i64: 1, 160>}, {pipeline_mode = #tpu.pipeline_mode<synchronous>, transform_indices = @transform_6, window_bounds = array<i64: 160, 20>}, {pipeline_mode = #tpu.pipeline_mode<synchronous>, transform_indices = @transform_7, window_bounds = array<i64: 1, 20>}, {transform_indices = @transform_8, window_bounds = array<i64: 8, 4>}]} {
    %c0 = arith.constant 0 : index
    %0 = memref.load %arg1[%c0] : memref<1xf32, #tpu.memory_space<smem>>
    %c0_0 = arith.constant 0 : index
    %c0_1 = arith.constant 0 : index
    %1 = vector.load %arg2[%c0_0, %c0_1] : memref<8x16xf32, #tpu.memory_space<vmem>>, vector<8x16xf32>
    %c0_2 = arith.constant 0 : index
    %c0_3 = arith.constant 0 : index
    %2 = vector.load %arg3[%c0_2, %c0_3] : memref<16x320xf32, #tpu.memory_space<vmem>>, vector<16x320xf32>
    %cst = arith.constant dense<0.000000e+00> : vector<8x320xf32>
    %3 = tpu.matmul %1, %2, %cst {dimension_numbers = #tpu.dot_dimension_numbers<[1], [0], [0], [1], [0, 0, 1, 1], [], []>} : vector<8x16xf32>, vector<16x320xf32>, vector<8x320xf32> -> vector<8x320xf32>
    %c0_4 = arith.constant 0 : index
    %c0_5 = arith.constant 0 : index
    %4 = vector.load %arg4[%c0_4, %c0_5] : memref<1x320xf32, #tpu.memory_space<vmem>>, vector<1x320xf32>
    %5 = vector.broadcast %4 : vector<1x320xf32> to vector<8x320xf32>
    %6 = arith.addf %3, %5 : vector<8x320xf32>
    %cst_6 = arith.constant 0.000000e+00 : f32
    %7 = vector.broadcast %cst_6 : f32 to vector<8x320xf32>
    %8 = arith.maximumf %6, %7 : vector<8x320xf32>
    %c0_7 = arith.constant 0 : index
    %c0_8 = arith.constant 0 : index
    %9 = vector.load %arg5[%c0_7, %c0_8] : memref<320x160xf32, #tpu.memory_space<vmem>>, vector<320x160xf32>
    %cst_9 = arith.constant dense<0.000000e+00> : vector<8x160xf32>
    %10 = tpu.matmul %8, %9, %cst_9 {dimension_numbers = #tpu.dot_dimension_numbers<[1], [0], [0], [1], [0, 0, 1, 1], [], []>} : vector<8x320xf32>, vector<320x160xf32>, vector<8x160xf32> -> vector<8x160xf32>
    %c0_10 = arith.constant 0 : index
    %c0_11 = arith.constant 0 : index
    %11 = vector.load %arg6[%c0_10, %c0_11] : memref<1x160xf32, #tpu.memory_space<vmem>>, vector<1x160xf32>
    %12 = vector.broadcast %11 : vector<1x160xf32> to vector<8x160xf32>
    %13 = arith.addf %10, %12 : vector<8x160xf32>
    %cst_12 = arith.constant 0.000000e+00 : f32
    %14 = vector.broadcast %cst_12 : f32 to vector<8x160xf32>
    %15 = arith.maximumf %13, %14 : vector<8x160xf32>
    %c0_13 = arith.constant 0 : index
    %c0_14 = arith.constant 0 : index
    %16 = vector.load %arg7[%c0_13, %c0_14] : memref<160x20xf32, #tpu.memory_space<vmem>>, vector<160x20xf32>
    %cst_15 = arith.constant dense<0.000000e+00> : vector<8x20xf32>
    %17 = tpu.matmul %15, %16, %cst_15 {dimension_numbers = #tpu.dot_dimension_numbers<[1], [0], [0], [1], [0, 0, 1, 1], [], []>} : vector<8x160xf32>, vector<160x20xf32>, vector<8x20xf32> -> vector<8x20xf32>
    %c0_16 = arith.constant 0 : index
    %c0_17 = arith.constant 0 : index
    %18 = vector.load %arg8[%c0_16, %c0_17] : memref<1x20xf32, #tpu.memory_space<vmem>>, vector<1x20xf32>
    %19 = vector.broadcast %18 : vector<1x20xf32> to vector<8x20xf32>
    %20 = arith.addf %17, %19 : vector<8x20xf32>
    %21 = vector.extract_strided_slice %20 {offsets = [0, 0], sizes = [8, 4], strides = [1, 1]} : vector<8x20xf32> to vector<8x4xf32>
    %22 = vector.extract_strided_slice %20 {offsets = [0, 4], sizes = [8, 4], strides = [1, 1]} : vector<8x20xf32> to vector<8x4xf32>
    %23 = arith.minimumf %21, %22 : vector<8x4xf32>
    %24 = arith.maximumf %21, %22 : vector<8x4xf32>
    %25 = vector.extract_strided_slice %20 {offsets = [0, 8], sizes = [8, 4], strides = [1, 1]} : vector<8x20xf32> to vector<8x4xf32>
    %26 = arith.minimumf %23, %25 : vector<8x4xf32>
    %27 = arith.maximumf %24, %25 : vector<8x4xf32>
    %28 = vector.extract_strided_slice %20 {offsets = [0, 12], sizes = [8, 4], strides = [1, 1]} : vector<8x20xf32> to vector<8x4xf32>
    %29 = arith.minimumf %26, %28 : vector<8x4xf32>
    %30 = arith.maximumf %27, %28 : vector<8x4xf32>
    %31 = vector.extract_strided_slice %20 {offsets = [0, 16], sizes = [8, 4], strides = [1, 1]} : vector<8x20xf32> to vector<8x4xf32>
    %32 = arith.minimumf %29, %31 : vector<8x4xf32>
    %33 = arith.maximumf %30, %31 : vector<8x4xf32>
    %34 = arith.subf %32, %33 : vector<8x4xf32>
    %35 = vector.broadcast %0 : f32 to vector<8x4xf32>
    %36 = arith.mulf %35, %34 : vector<8x4xf32>
    %37 = arith.addf %33, %36 : vector<8x4xf32>
    %c0_18 = arith.constant 0 : index
    %c0_19 = arith.constant 0 : index
    %38 = vector.load %arg9[%c0_18, %c0_19] : memref<8x4xf32, #tpu.memory_space<vmem>>, vector<8x4xf32>
    tpu.vector_store %arg9[%c0_18, %c0_19], %37 {strides = array<i32>} : memref<8x4xf32, #tpu.memory_space<vmem>>, vector<8x4xf32>,
    return
  }
  func.func @transform_0(%arg0: i32) -> i32 {
    %c0_i32 = arith.constant 0 : i32
    %c0_i32_0 = arith.constant 0 : i32
    return %c0_i32 : i32
  }
  func.func @transform_1(%arg0: i32) -> (i32, i32) {
    %c0_i32 = arith.constant 0 : i32
    %c0_i32_0 = arith.constant 0 : i32
    return %arg0, %c0_i32 : i32, i32
  }
  func.func @transform_2(%arg0: i32) -> (i32, i32) {
    %c0_i32 = arith.constant 0 : i32
    %c0_i32_0 = arith.constant 0 : i32
    %c0_i32_1 = arith.constant 0 : i32
    return %c0_i32, %c0_i32_0 : i32, i32
  }
  func.func @transform_3(%arg0: i32) -> (i32, i32) {
    %c0_i32 = arith.constant 0 : i32
    %c0_i32_0 = arith.constant 0 : i32
    %c0_i32_1 = arith.constant 0 : i32
    return %c0_i32, %c0_i32_0 : i32, i32
  }
  func.func @transform_4(%arg0: i32) -> (i32, i32) {
    %c0_i32 = arith.constant 0 : i32
    %c0_i32_0 = arith.constant 0 : i32
    %c0_i32_1 = arith.constant 0 : i32
    return %c0_i32, %c0_i32_0 : i32, i32
  }
  func.func @transform_5(%arg0: i32) -> (i32, i32) {
    %c0_i32 = arith.constant 0 : i32
    %c0_i32_0 = arith.constant 0 : i32
    %c0_i32_1 = arith.constant 0 : i32
    return %c0_i32, %c0_i32_0 : i32, i32
  }
  func.func @transform_6(%arg0: i32) -> (i32, i32) {
    %c0_i32 = arith.constant 0 : i32
    %c0_i32_0 = arith.constant 0 : i32
    %c0_i32_1 = arith.constant 0 : i32
    return %c0_i32, %c0_i32_0 : i32, i32
  }
  func.func @transform_7(%arg0: i32) -> (i32, i32) {
    %c0_i32 = arith.constant 0 : i32
    %c0_i32_0 = arith.constant 0 : i32
    %c0_i32_1 = arith.constant 0 : i32
    return %c0_i32, %c0_i32_0 : i32, i32
  }
  func.func @transform_8(%arg0: i32) -> (i32, i32) {
    %c0_i32 = arith.constant 0 : i32
    %c0_i32_0 = arith.constant 0 : i32
    return %arg0, %c0_i32 : i32, i32
  }
}

</mosaic_0001>

<llo_original>
// kernel: tpu_custom_call.1
$region0: #{tpu_custom_call.1}
  #allocation0 [shape = 'u32[]', space=smem, size = 0x4, offset = 0x4, fixed_abs, tag = 'smem constant byte address 0x4 - core index']
  #allocation1 [shape = 'u32[144,128]{1,0:T(1,128)}', space=vmem, size = 0x12000, scoped, tag = 'internal scratch']
  #allocation2 [shape = 'f32[1]{0:T(128)S(6)}', space=smem, size = 0x200, scoped, tag = 'scoped memory for tpu_custom_call.1']
  %s0 = inlined_call_operand.<no memory space> [shape: f32[1], index: 0, kind: input, shape index: {}]
  %s1 = inlined_call_operand.vmem [shape: f32[8,16], index: 1, kind: input, shape index: {}]
  %s2 = inlined_call_operand.vmem [shape: f32[16,320], index: 2, kind: input, shape index: {}]
  %s3 = inlined_call_operand.vmem [shape: f32[1,320], index: 3, kind: input, shape index: {}]
  %s4 = inlined_call_operand.vmem [shape: f32[320,160], index: 4, kind: input, shape index: {}]
  %s5 = inlined_call_operand.vmem [shape: f32[1,160], index: 5, kind: input, shape index: {}]
  %s6 = inlined_call_operand.vmem [shape: f32[160,20], index: 6, kind: input, shape index: {}]
  %s7 = inlined_call_operand.vmem [shape: f32[1,20], index: 7, kind: input, shape index: {}]
  %s8 = inlined_call_operand.vmem [shape: f32[8,4], index: 8, kind: output, shape index: {}]
  %s9 = sld [smem:[#allocation0]]
  $region42: #{tpu_custom_call.1} parent=0
    _
  %s11 = ssub.s32 1, %s9
  %s12 = scalar_select 0, %s11, %s9
  %13 = sst [smem:[#allocation2]] %s0
  // Predicated region
  $region2: #{tpu_custom_call.1} parent=0 // pred_check
    _
  $region3: #{tpu_custom_call.1} parent=0 // pred_check_branch
    %15 = sbr.rel (0) target = $region5
  $region4: #{tpu_custom_call.1} parent=0 // pred_region
    _
  $region5: #{tpu_custom_call.1} parent=0 // pred_fallthru
    _
  // Predicated region
  $region6: #{tpu_custom_call.1} parent=0 // pred_check
    _
  $region7: #{tpu_custom_call.1} parent=0 // pred_check_branch
    %17 = sbr.rel (0) target = $region9
  $region8: #{tpu_custom_call.1} parent=0 // pred_region
    _
  $region9: #{tpu_custom_call.1} parent=0 // pred_fallthru
    _
  // Predicated region
  $region10: #{tpu_custom_call.1} parent=0 // pred_check
    _
  $region11: #{tpu_custom_call.1} parent=0 // pred_check_branch
    %19 = sbr.rel (0) target = $region13
  $region12: #{tpu_custom_call.1} parent=0 // pred_region
    _
  $region13: #{tpu_custom_call.1} parent=0 // pred_fallthru
    _
  // Predicated region
  $region14: #{tpu_custom_call.1} parent=0 // pred_check
    _
  $region15: #{tpu_custom_call.1} parent=0 // pred_check_branch
    %21 = sbr.rel (0) target = $region17
  $region16: #{tpu_custom_call.1} parent=0 // pred_region
    _
  $region17: #{tpu_custom_call.1} parent=0 // pred_fallthru
    _
  // Predicated region
  $region18: #{tpu_custom_call.1} parent=0 // pred_check
    _
  $region19: #{tpu_custom_call.1} parent=0 // pred_check_branch
    %23 = sbr.rel (0) target = $region21
  $region20: #{tpu_custom_call.1} parent=0 // pred_region
    _
  $region21: #{tpu_custom_call.1} parent=0 // pred_fallthru
    _
  // Predicated region
  $region22: #{tpu_custom_call.1} parent=0 // pred_check
    _
  $region23: #{tpu_custom_call.1} parent=0 // pred_check_branch
    %25 = sbr.rel (0) target = $region25
  $region24: #{tpu_custom_call.1} parent=0 // pred_region
    _
  $region25: #{tpu_custom_call.1} parent=0 // pred_fallthru
    _
  // Predicated region
  $region26: #{tpu_custom_call.1} parent=0 // pred_check
    _
  $region27: #{tpu_custom_call.1} parent=0 // pred_check_branch
    %27 = sbr.rel (0) target = $region29
  $region28: #{tpu_custom_call.1} parent=0 // pred_region
    _
  $region29: #{tpu_custom_call.1} parent=0 // pred_fallthru
    _
  // Predicated region
  $region30: #{tpu_custom_call.1} parent=0 // pred_check
    _
  $region31: #{tpu_custom_call.1} parent=0 // pred_check_branch
    %29 = sbr.rel (0) target = $region33
  $region32: #{tpu_custom_call.1} parent=0 // pred_region
    _
  $region33: #{tpu_custom_call.1} parent=0 // pred_fallthru
    _
  %s30 = sld [smem:[#allocation2]]
  %v31 = vld [vmem:[%s1] sm:$0xff]
  %v32 = vld [vmem:[%s2] sm:$0xff]
  %v33 = vld [vmem:[%s2 + $0x8] sm:$0xff]
  %v34 = vld [vmem:[%s2 + $0x10] sm:$0xff]
  %v35 = vld [vmem:[%s2 + $0x18] sm:$0xff]
  %v36 = vld [vmem:[%s2 + $0x20] sm:$0xff]
  %v37 = vld [vmem:[%s2 + $0x28] sm:$0xff]
  %v38 = vld [vmem:[%s3] sm:$0x7]
  %v40 = vlaneseq
  %v41 = vshrl.u32 %v40, 7
  %v42 = vsub.s32 0, %v41
  %v43 = vrot.slane %v38, %v42
  %v44 = vlaneseq
  %v45 = vshrl.u32 %v44, 7
  %v46 = vsub.s32 1, %v45
  %v47 = vrot.slane %v38, %v46
  %v48 = vlaneseq
  %v49 = vshrl.u32 %v48, 7
  %v50 = vsub.s32 2, %v49
  %v51 = vrot.slane %v38, %v50
  %vm55 = vcmask 130048
  %v57 = vsel %vm55, %v31, 0
  %59 = vmatprep.subr.mxu0 %v33
  %60 = vmatpush1.msra.mxu0 %v32
  %61 = vmatprep.subr.mxu0 %v36
  %62 = vmatpush1.msra.mxu0 %v35
  %63 = vmatprep.subr.mxu0 0.0
  %64 = vmatpush1.msra.mxu0 0.0
  %65 = vmatprep.subr.mxu0 0.0
  %66 = vmatpush1.msra.mxu0 0.0
  %67 = vmatprep.subr.mxu0 0.0
  %68 = vmatpush1.msra.mxu0 0.0
  %69 = vmatprep.subr.mxu0 0.0
  %70 = vmatpush1.msra.mxu0 0.0
  %71 = vmatprep.subr.mxu0 0.0
  %72 = vmatpush1.msra.mxu0 0.0
  %73 = vmatprep.subr.mxu0 0.0
  %74 = vmatpush1.msra.mxu0 0.0
  %75 = vmatprep.subr.mxu0 0.0
  %76 = vmatpush1.msra.mxu0 0.0
  %77 = vmatprep.subr.mxu0 0.0
  %78 = vmatpush1.msra.mxu0 0.0
  %79 = vmatprep.subr.mxu0 0.0
  %80 = vmatpush1.msra.mxu0 0.0
  %81 = vmatprep.subr.mxu0 0.0
  %82 = vmatpush1.msra.mxu0 0.0
  %83 = vmatprep.subr.mxu0 0.0
  %84 = vmatpush1.msra.mxu0 0.0
  %85 = vmatprep.subr.mxu0 0.0
  %86 = vmatpush1.msra.mxu0 0.0
  %87 = vmatprep.subr.mxu0 0.0
  %88 = vmatpush1.msra.mxu0 0.0
  %89 = vmatprep.subr.mxu0 0.0
  %90 = vmatpush1.msra.mxu0 0.0
  %91 = vmatprep.subr.mxu0 0.0
  %92 = vmatpush1.msra.mxu0 0.0
  %93 = vmatprep.subr.mxu0 0.0
  %94 = vmatpush1.msra.mxu0 0.0
  %95 = vmatprep.subr.mxu0 0.0
  %96 = vmatpush1.msra.mxu0 0.0
  %97 = vmatprep.subr.mxu0 0.0
  %98 = vmatpush1.msra.mxu0 0.0
  %99 = vmatprep.subr.mxu0 0.0
  %100 = vmatpush1.msra.mxu0 0.0
  %101 = vmatprep.subr.mxu0 0.0
  %102 = vmatpush1.msra.mxu0 0.0
  %103 = vmatprep.subr.mxu0 0.0
  %104 = vmatpush1.msra.mxu0 0.0
  %105 = vmatprep.subr.mxu0 0.0
  %106 = vmatpush1.msra.mxu0 0.0
  %107 = vmatprep.subr.mxu0 0.0
  %108 = vmatpush1.msra.mxu0 0.0
  %109 = vmatprep.subr.mxu0 0.0
  %110 = vmatpush1.msra.mxu0 0.0
  %111 = vmatprep.subr.mxu0 0.0
  %112 = vmatpush1.msra.mxu0 0.0
  %113 = vmatprep.subr.mxu0 0.0
  %114 = vmatpush1.msra.mxu0 0.0
  %115 = vmatprep.subr.mxu0 0.0
  %116 = vmatpush1.msra.mxu0 0.0
  %117 = vmatprep.subr.mxu0 0.0
  %118 = vmatpush1.msra.mxu0 0.0
  %119 = vmatprep.subr.mxu0 0.0
  %120 = vmatpush1.msra.mxu0 0.0
  %121 = vmatprep.subr.mxu0 0.0
  %122 = vmatpush1.msra.mxu0 0.0
  %123 = vmatprep.mubr.f32.mxu0 0.0
  %124 = vmatmul.mubr.f32.gmra.mrb[0].mxu0 %v57
  %v125 = vpop.f32.mrb[0].mxu0
  %v126 = vadd.f32 %v43, %v125
  %v127 = vpop.f32.mrb[0].mxu0
  %v128 = vadd.f32 %v47, %v127
  %129 = vdwg.mxu0
  %130 = vmatprep.subr.mxu0 0.0
  %131 = vmatpush1.msra.mxu0 %v34
  %132 = vmatprep.subr.mxu0 0.0
  %133 = vmatpush1.msra.mxu0 %v37
  %134 = vmatprep.subr.mxu0 0.0
  %135 = vmatpush1.msra.mxu0 0.0
  %136 = vmatprep.subr.mxu0 0.0
  %137 = vmatpush1.msra.mxu0 0.0
  %138 = vmatprep.subr.mxu0 0.0
  %139 = vmatpush1.msra.mxu0 0.0
  %140 = vmatprep.subr.mxu0 0.0
  %141 = vmatpush1.msra.mxu0 0.0
  %142 = vmatprep.subr.mxu0 0.0
  %143 = vmatpush1.msra.mxu0 0.0
  %144 = vmatprep.subr.mxu0 0.0
  %145 = vmatpush1.msra.mxu0 0.0
  %146 = vmatprep.subr.mxu0 0.0
  %147 = vmatpush1.msra.mxu0 0.0
  %148 = vmatprep.subr.mxu0 0.0
  %149 = vmatpush1.msra.mxu0 0.0
  %150 = vmatprep.subr.mxu0 0.0
  %151 = vmatpush1.msra.mxu0 0.0
  %152 = vmatprep.subr.mxu0 0.0
  %153 = vmatpush1.msra.mxu0 0.0
  %154 = vmatprep.subr.mxu0 0.0
  %155 = vmatpush1.msra.mxu0 0.0
  %156 = vmatprep.subr.mxu0 0.0
  %157 = vmatpush1.msra.mxu0 0.0
  %158 = vmatprep.subr.mxu0 0.0
  %159 = vmatpush1.msra.mxu0 0.0
  %160 = vmatprep.subr.mxu0 0.0
  %161 = vmatpush1.msra.mxu0 0.0
  %162 = vmatprep.subr.mxu0 0.0
  %163 = vmatpush1.msra.mxu0 0.0
  %164 = vmatprep.subr.mxu0 0.0
  %165 = vmatpush1.msra.mxu0 0.0
  %166 = vmatprep.subr.mxu0 0.0
  %167 = vmatpush1.msra.mxu0 0.0
  %168 = vmatprep.subr.mxu0 0.0
  %169 = vmatpush1.msra.mxu0 0.0
  %170 = vmatprep.subr.mxu0 0.0
  %171 = vmatpush1.msra.mxu0 0.0
  %172 = vmatprep.subr.mxu0 0.0
  %173 = vmatpush1.msra.mxu0 0.0
  %174 = vmatprep.subr.mxu0 0.0
  %175 = vmatpush1.msra.mxu0 0.0
  %176 = vmatprep.subr.mxu0 0.0
  %177 = vmatpush1.msra.mxu0 0.0
  %178 = vmatprep.subr.mxu0 0.0
  %179 = vmatpush1.msra.mxu0 0.0
  %180 = vmatprep.subr.mxu0 0.0
  %181 = vmatpush1.msra.mxu0 0.0
  %182 = vmatprep.subr.mxu0 0.0
  %183 = vmatpush1.msra.mxu0 0.0
  %184 = vmatprep.subr.mxu0 0.0
  %185 = vmatpush1.msra.mxu0 0.0
  %186 = vmatprep.subr.mxu0 0.0
  %187 = vmatpush1.msra.mxu0 0.0
  %188 = vmatprep.subr.mxu0 0.0
  %189 = vmatpush1.msra.mxu0 0.0
  %190 = vmatprep.subr.mxu0 0.0
  %191 = vmatpush1.msra.mxu0 0.0
  %192 = vmatprep.subr.mxu0 0.0
  %193 = vmatpush1.msra.mxu0 0.0
  %194 = vmatprep.mubr.f32.mxu0 0.0
  %195 = vmatmul.mubr.f32.gmra.mrb[0].mxu0 %v57
  %v196 = vpop.f32.mrb[0].mxu0
  %v197 = vadd.f32 %v51, %v196
  %v198 = vpop.f32.mrb[0].mxu0
  %199 = vdwg.mxu0
  %v200 = vmax.f32 %v126, 0.0
  %v201 = vmax.f32 %v128, 0.0
  %v202 = vmax.f32 %v197, 0.0
  %v203 = vld [vmem:[%s4] sm:$0xff]
  %v204 = vld [vmem:[%s4 + $0x8] sm:$0xff]
  %v205 = vld [vmem:[%s4 + $0x10] sm:$0xff]
  %v206 = vld [vmem:[%s4 + $0x18] sm:$0xff]
  %v207 = vld [vmem:[%s4 + $0x20] sm:$0xff]
  %v208 = vld [vmem:[%s4 + $0x28] sm:$0xff]
  %v209 = vld [vmem:[%s4 + $0x30] sm:$0xff]
  %v210 = vld [vmem:[%s4 + $0x38] sm:$0xff]
  %v211 = vld [vmem:[%s4 + $0x40] sm:$0xff]
  %v212 = vld [vmem:[%s4 + $0x48] sm:$0xff]
  %v213 = vld [vmem:[%s4 + $0x50] sm:$0xff]
  %v214 = vld [vmem:[%s4 + $0x58] sm:$0xff]
  %v215 = vld [vmem:[%s4 + $0x60] sm:$0xff]
  %v216 = vld [vmem:[%s4 + $0x68] sm:$0xff]
  %v217 = vld [vmem:[%s4 + $0x70] sm:$0xff]
  %v218 = vld [vmem:[%s4 + $0x78] sm:$0xff]
  %v219 = vld [vmem:[%s4 + $0x80] sm:$0xff]
  %v220 = vld [vmem:[%s4 + $0x88] sm:$0xff]
  %v221 = vld [vmem:[%s4 + $0x90] sm:$0xff]
  %v222 = vld [vmem:[%s4 + $0x98] sm:$0xff]
  %v223 = vld [vmem:[%s4 + $0xa0] sm:$0xff]
  %v224 = vld [vmem:[%s4 + $0xa8] sm:$0xff]
  %v225 = vld [vmem:[%s4 + $0xb0] sm:$0xff]
  %v226 = vld [vmem:[%s4 + $0xb8] sm:$0xff]
  %v227 = vld [vmem:[%s4 + $0xc0] sm:$0xff]
  %v228 = vld [vmem:[%s4 + $0xc8] sm:$0xff]
  %v229 = vld [vmem:[%s4 + $0xd0] sm:$0xff]
  %v230 = vld [vmem:[%s4 + $0xd8] sm:$0xff]
  %v231 = vld [vmem:[%s4 + $0xe0] sm:$0xff]
  %v232 = vld [vmem:[%s4 + $0xe8] sm:$0xff]
  %v233 = vld [vmem:[%s4 + $0xf0] sm:$0xff]
  %v234 = vld [vmem:[%s4 + $0xf8] sm:$0xff]
  %v235 = vld [vmem:[%s4 + $0x100] sm:$0xff]
  %v236 = vld [vmem:[%s4 + $0x108] sm:$0xff]
  %v237 = vld [vmem:[%s4 + $0x110] sm:$0xff]
  %v238 = vld [vmem:[%s4 + $0x118] sm:$0xff]
  %v239 = vld [vmem:[%s4 + $0x120] sm:$0xff]
  %v240 = vld [vmem:[%s4 + $0x128] sm:$0xff]
  %v241 = vld [vmem:[%s4 + $0x130] sm:$0xff]
  %v242 = vld [vmem:[%s4 + $0x138] sm:$0xff]
  %v243 = vld [vmem:[%s4 + $0x140] sm:$0xff]
  %v244 = vld [vmem:[%s4 + $0x148] sm:$0xff]
  %v245 = vld [vmem:[%s4 + $0x150] sm:$0xff]
  %v246 = vld [vmem:[%s4 + $0x158] sm:$0xff]
  %v247 = vld [vmem:[%s4 + $0x160] sm:$0xff]
  %v248 = vld [vmem:[%s4 + $0x168] sm:$0xff]
  %v249 = vld [vmem:[%s4 + $0x170] sm:$0xff]
  %v250 = vld [vmem:[%s4 + $0x178] sm:$0xff]
  %v251 = vld [vmem:[%s4 + $0x180] sm:$0xff]
  %v252 = vld [vmem:[%s4 + $0x188] sm:$0xff]
  %v253 = vld [vmem:[%s4 + $0x190] sm:$0xff]
  %v254 = vld [vmem:[%s4 + $0x198] sm:$0xff]
  %v255 = vld [vmem:[%s4 + $0x1a0] sm:$0xff]
  %v256 = vld [vmem:[%s4 + $0x1a8] sm:$0xff]
  %v257 = vld [vmem:[%s4 + $0x1b0] sm:$0xff]
  %v258 = vld [vmem:[%s4 + $0x1b8] sm:$0xff]
  %v259 = vld [vmem:[%s4 + $0x1c0] sm:$0xff]
  %v260 = vld [vmem:[%s4 + $0x1c8] sm:$0xff]
  %v261 = vld [vmem:[%s4 + $0x1d0] sm:$0xff]
  %v262 = vld [vmem:[%s4 + $0x1d8] sm:$0xff]
  %v263 = vld [vmem:[%s4 + $0x1e0] sm:$0xff]
  %v264 = vld [vmem:[%s4 + $0x1e8] sm:$0xff]
  %v265 = vld [vmem:[%s4 + $0x1f0] sm:$0xff]
  %v266 = vld [vmem:[%s4 + $0x1f8] sm:$0xff]
  %v267 = vld [vmem:[%s4 + $0x200] sm:$0xff]
  %v268 = vld [vmem:[%s4 + $0x208] sm:$0xff]
  %v269 = vld [vmem:[%s4 + $0x210] sm:$0xff]
  %v270 = vld [vmem:[%s4 + $0x218] sm:$0xff]
  %v271 = vld [vmem:[%s4 + $0x220] sm:$0xff]
  %v272 = vld [vmem:[%s4 + $0x228] sm:$0xff]
  %v273 = vld [vmem:[%s4 + $0x230] sm:$0xff]
  %v274 = vld [vmem:[%s4 + $0x238] sm:$0xff]
  %v275 = vld [vmem:[%s4 + $0x240] sm:$0xff]
  %v276 = vld [vmem:[%s4 + $0x248] sm:$0xff]
  %v277 = vld [vmem:[%s4 + $0x250] sm:$0xff]
  %v278 = vld [vmem:[%s4 + $0x258] sm:$0xff]
  %v279 = vld [vmem:[%s4 + $0x260] sm:$0xff]
  %v280 = vld [vmem:[%s4 + $0x268] sm:$0xff]
  %v281 = vld [vmem:[%s4 + $0x270] sm:$0xff]
  %v282 = vld [vmem:[%s4 + $0x278] sm:$0xff]
  %v283 = vld [vmem:[%s5] sm:$0x3]
  %v285 = vlaneseq
  %v286 = vshrl.u32 %v285, 7
  %v287 = vsub.s32 0, %v286
  %v288 = vrot.slane %v283, %v287
  %v289 = vlaneseq
  %v290 = vshrl.u32 %v289, 7
  %v291 = vsub.s32 1, %v290
  %v292 = vrot.slane %v283, %v291
  %vm295 = vcmask 523264
  %v297 = vsel %vm295, %v202, 0
  %299 = vmatprep.subr.mxu0 %v204
  %300 = vmatpush1.msra.mxu0 %v203
  %301 = vmatprep.subr.mxu0 %v206
  %302 = vmatpush1.msra.mxu0 %v205
  %303 = vmatprep.subr.mxu0 %v208
  %304 = vmatpush1.msra.mxu0 %v207
  %305 = vmatprep.subr.mxu0 %v210
  %306 = vmatpush1.msra.mxu0 %v209
  %307 = vmatprep.subr.mxu0 %v212
  %308 = vmatpush1.msra.mxu0 %v211
  %309 = vmatprep.subr.mxu0 %v214
  %310 = vmatpush1.msra.mxu0 %v213
  %311 = vmatprep.subr.mxu0 %v216
  %312 = vmatpush1.msra.mxu0 %v215
  %313 = vmatprep.subr.mxu0 %v218
  %314 = vmatpush1.msra.mxu0 %v217
  %315 = vmatprep.subr.mxu0 %v220
  %316 = vmatpush1.msra.mxu0 %v219
  %317 = vmatprep.subr.mxu0 %v222
  %318 = vmatpush1.msra.mxu0 %v221
  %319 = vmatprep.subr.mxu0 %v224
  %320 = vmatpush1.msra.mxu0 %v223
  %321 = vmatprep.subr.mxu0 %v226
  %322 = vmatpush1.msra.mxu0 %v225
  %323 = vmatprep.subr.mxu0 %v228
  %324 = vmatpush1.msra.mxu0 %v227
  %325 = vmatprep.subr.mxu0 %v230
  %326 = vmatpush1.msra.mxu0 %v229
  %327 = vmatprep.subr.mxu0 %v232
  %328 = vmatpush1.msra.mxu0 %v231
  %329 = vmatprep.subr.mxu0 %v234
  %330 = vmatpush1.msra.mxu0 %v233
  %331 = vmatprep.subr.mxu0 %v236
  %332 = vmatpush1.msra.mxu0 %v235
  %333 = vmatprep.subr.mxu0 %v238
  %334 = vmatpush1.msra.mxu0 %v237
  %335 = vmatprep.subr.mxu0 %v240
  %336 = vmatpush1.msra.mxu0 %v239
  %337 = vmatprep.subr.mxu0 %v242
  %338 = vmatpush1.msra.mxu0 %v241
  %339 = vmatprep.subr.mxu0 %v244
  %340 = vmatpush1.msra.mxu0 %v243
  %341 = vmatprep.subr.mxu0 %v246
  %342 = vmatpush1.msra.mxu0 %v245
  %343 = vmatprep.subr.mxu0 %v248
  %344 = vmatpush1.msra.mxu0 %v247
  %345 = vmatprep.subr.mxu0 %v250
  %346 = vmatpush1.msra.mxu0 %v249
  %347 = vmatprep.subr.mxu0 %v252
  %348 = vmatpush1.msra.mxu0 %v251
  %349 = vmatprep.subr.mxu0 %v254
  %350 = vmatpush1.msra.mxu0 %v253
  %351 = vmatprep.subr.mxu0 %v256
  %352 = vmatpush1.msra.mxu0 %v255
  %353 = vmatprep.subr.mxu0 %v258
  %354 = vmatpush1.msra.mxu0 %v257
  %355 = vmatprep.subr.mxu0 %v260
  %356 = vmatpush1.msra.mxu0 %v259
  %357 = vmatprep.subr.mxu0 %v262
  %358 = vmatpush1.msra.mxu0 %v261
  %359 = vmatprep.subr.mxu0 %v264
  %360 = vmatpush1.msra.mxu0 %v263
  %361 = vmatprep.subr.mxu0 %v266
  %362 = vmatpush1.msra.mxu0 %v265
  %363 = vmatprep.mubr.f32.mxu0 %v201
  %364 = vmatmul.mubr.f32.gmra.mrb[0].mxu0 %v200
  %v365 = vpop.f32.mrb[0].mxu0
  %v366 = vadd.f32 %v288, %v365
  %v367 = vpop.f32.mrb[0].mxu0
  %v368 = vadd.f32 %v292, %v367
  %369 = vdwg.mxu0
  %370 = vmatprep.subr.mxu0 %v268
  %371 = vmatpush1.msra.mxu0 %v267
  %372 = vmatprep.subr.mxu0 %v270
  %373 = vmatpush1.msra.mxu0 %v269
  %374 = vmatprep.subr.mxu0 %v272
  %375 = vmatpush1.msra.mxu0 %v271
  %376 = vmatprep.subr.mxu0 %v274
  %377 = vmatpush1.msra.mxu0 %v273
  %378 = vmatprep.subr.mxu0 %v276
  %379 = vmatpush1.msra.mxu0 %v275
  %380 = vmatprep.subr.mxu0 %v278
  %381 = vmatpush1.msra.mxu0 %v277
  %382 = vmatprep.subr.mxu0 %v280
  %383 = vmatpush1.msra.mxu0 %v279
  %384 = vmatprep.subr.mxu0 %v282
  %385 = vmatpush1.msra.mxu0 %v281
  %386 = vmatprep.subr.mxu0 0.0
  %387 = vmatpush1.msra.mxu0 0.0
  %388 = vmatprep.subr.mxu0 0.0
  %389 = vmatpush1.msra.mxu0 0.0
  %390 = vmatprep.subr.mxu0 0.0
  %391 = vmatpush1.msra.mxu0 0.0
  %392 = vmatprep.subr.mxu0 0.0
  %393 = vmatpush1.msra.mxu0 0.0
  %394 = vmatprep.subr.mxu0 0.0
  %395 = vmatpush1.msra.mxu0 0.0
  %396 = vmatprep.subr.mxu0 0.0
  %397 = vmatpush1.msra.mxu0 0.0
  %398 = vmatprep.subr.mxu0 0.0
  %399 = vmatpush1.msra.mxu0 0.0
  %400 = vmatprep.subr.mxu0 0.0
  %401 = vmatpush1.msra.mxu0 0.0
  %402 = vmatprep.subr.mxu0 0.0
  %403 = vmatpush1.msra.mxu0 0.0
  %404 = vmatprep.subr.mxu0 0.0
  %405 = vmatpush1.msra.mxu0 0.0
  %406 = vmatprep.subr.mxu0 0.0
  %407 = vmatpush1.msra.mxu0 0.0
  %408 = vmatprep.subr.mxu0 0.0
  %409 = vmatpush1.msra.mxu0 0.0
  %410 = vmatprep.subr.mxu0 0.0
  %411 = vmatpush1.msra.mxu0 0.0
  %412 = vmatprep.subr.mxu0 0.0
  %413 = vmatpush1.msra.mxu0 0.0
  %414 = vmatprep.subr.mxu0 0.0
  %415 = vmatpush1.msra.mxu0 0.0
  %416 = vmatprep.subr.mxu0 0.0
  %417 = vmatpush1.msra.mxu0 0.0
  %418 = vmatprep.subr.mxu0 0.0
  %419 = vmatpush1.msra.mxu0 0.0
  %420 = vmatprep.subr.mxu0 0.0
  %421 = vmatpush1.msra.mxu0 0.0
  %422 = vmatprep.subr.mxu0 0.0
  %423 = vmatpush1.msra.mxu0 0.0
  %424 = vmatprep.subr.mxu0 0.0
  %425 = vmatpush1.msra.mxu0 0.0
  %426 = vmatprep.subr.mxu0 0.0
  %427 = vmatpush1.msra.mxu0 0.0
  %428 = vmatprep.subr.mxu0 0.0
  %429 = vmatpush1.msra.mxu0 0.0
  %430 = vmatprep.subr.mxu0 0.0
  %431 = vmatpush1.msra.mxu0 0.0
  %432 = vmatprep.subr.mxu0 0.0
  %433 = vmatpush1.msra.mxu0 0.0
  %434 = vmatprep.mubr.f32.mxu0 0.0
  %435 = vmatmul.mubr.f32.gmra.mrb[0].mxu0 %v297
  %v436 = vpop.f32.mrb[0].mxu0
  %v437 = vadd.f32 %v366, %v436
  %v438 = vpop.f32.mrb[0].mxu0
  %v439 = vadd.f32 %v368, %v438
  %440 = vdwg.mxu0
  %v441 = vmax.f32 %v437, 0.0
  %v442 = vmax.f32 %v439, 0.0
  %v443 = vld [vmem:[%s6] sm:$0xff]
  %v444 = vld [vmem:[%s6 + $0x8] sm:$0xff]
  %v445 = vld [vmem:[%s6 + $0x10] sm:$0xff]
  %v446 = vld [vmem:[%s6 + $0x18] sm:$0xff]
  %v447 = vld [vmem:[%s6 + $0x20] sm:$0xff]
  %v448 = vld [vmem:[%s6 + $0x28] sm:$0xff]
  %v449 = vld [vmem:[%s6 + $0x30] sm:$0xff]
  %v450 = vld [vmem:[%s6 + $0x38] sm:$0xff]
  %v451 = vld [vmem:[%s6 + $0x40] sm:$0xff]
  %v452 = vld [vmem:[%s6 + $0x48] sm:$0xff]
  %v453 = vld [vmem:[%s6 + $0x50] sm:$0xff]
  %v454 = vld [vmem:[%s6 + $0x58] sm:$0xff]
  %v455 = vld [vmem:[%s6 + $0x60] sm:$0xff]
  %v456 = vld [vmem:[%s6 + $0x68] sm:$0xff]
  %v457 = vld [vmem:[%s6 + $0x70] sm:$0xff]
  %v458 = vld [vmem:[%s6 + $0x78] sm:$0xff]
  %v459 = vld [vmem:[%s6 + $0x80] sm:$0xff]
  %v460 = vld [vmem:[%s6 + $0x88] sm:$0xff]
  %v461 = vld [vmem:[%s6 + $0x90] sm:$0xff]
  %v462 = vld [vmem:[%s6 + $0x98] sm:$0xff]
  %v463 = vld [vmem:[%s7] sm:$0x1]
  %v465 = vlaneseq
  %v466 = vshrl.u32 %v465, 7
  %v467 = vsub.s32 0, %v466
  %v468 = vrot.slane %v463, %v467
  %vm470 = vcmask 261120
  %v472 = vsel %vm470, %v442, 0
  %474 = vmatprep.subr.mxu0 0.0
  %475 = vmatpush1.msra.mxu0 %v443
  %476 = vmatprep.subr.mxu0 0.0
  %477 = vmatpush1.msra.mxu0 %v444
  %478 = vmatprep.subr.mxu0 0.0
  %479 = vmatpush1.msra.mxu0 %v445
  %480 = vmatprep.subr.mxu0 0.0
  %481 = vmatpush1.msra.mxu0 %v446
  %482 = vmatprep.subr.mxu0 0.0
  %483 = vmatpush1.msra.mxu0 %v447
  %484 = vmatprep.subr.mxu0 0.0
  %485 = vmatpush1.msra.mxu0 %v448
  %486 = vmatprep.subr.mxu0 0.0
  %487 = vmatpush1.msra.mxu0 %v449
  %488 = vmatprep.subr.mxu0 0.0
  %489 = vmatpush1.msra.mxu0 %v450
  %490 = vmatprep.subr.mxu0 0.0
  %491 = vmatpush1.msra.mxu0 %v451
  %492 = vmatprep.subr.mxu0 0.0
  %493 = vmatpush1.msra.mxu0 %v452
  %494 = vmatprep.subr.mxu0 0.0
  %495 = vmatpush1.msra.mxu0 %v453
  %496 = vmatprep.subr.mxu0 0.0
  %497 = vmatpush1.msra.mxu0 %v454
  %498 = vmatprep.subr.mxu0 0.0
  %499 = vmatpush1.msra.mxu0 %v455
  %500 = vmatprep.subr.mxu0 0.0
  %501 = vmatpush1.msra.mxu0 %v456
  %502 = vmatprep.subr.mxu0 0.0
  %503 = vmatpush1.msra.mxu0 %v457
  %504 = vmatprep.subr.mxu0 0.0
  %505 = vmatpush1.msra.mxu0 %v458
  %506 = vmatprep.subr.mxu0 0.0
  %507 = vmatpush1.msra.mxu0 %v459
  %508 = vmatprep.subr.mxu0 0.0
  %509 = vmatpush1.msra.mxu0 %v460
  %510 = vmatprep.subr.mxu0 0.0
  %511 = vmatpush1.msra.mxu0 %v461
  %512 = vmatprep.subr.mxu0 0.0
  %513 = vmatpush1.msra.mxu0 %v462
  %514 = vmatprep.subr.mxu0 0.0
  %515 = vmatpush1.msra.mxu0 0.0
  %516 = vmatprep.subr.mxu0 0.0
  %517 = vmatpush1.msra.mxu0 0.0
  %518 = vmatprep.subr.mxu0 0.0
  %519 = vmatpush1.msra.mxu0 0.0
  %520 = vmatprep.subr.mxu0 0.0
  %521 = vmatpush1.msra.mxu0 0.0
  %522 = vmatprep.subr.mxu0 0.0
  %523 = vmatpush1.msra.mxu0 0.0
  %524 = vmatprep.subr.mxu0 0.0
  %525 = vmatpush1.msra.mxu0 0.0
  %526 = vmatprep.subr.mxu0 0.0
  %527 = vmatpush1.msra.mxu0 0.0
  %528 = vmatprep.subr.mxu0 0.0
  %529 = vmatpush1.msra.mxu0 0.0
  %530 = vmatprep.subr.mxu0 0.0
  %531 = vmatpush1.msra.mxu0 0.0
  %532 = vmatprep.subr.mxu0 0.0
  %533 = vmatpush1.msra.mxu0 0.0
  %534 = vmatprep.subr.mxu0 0.0
  %535 = vmatpush1.msra.mxu0 0.0
  %536 = vmatprep.subr.mxu0 0.0
  %537 = vmatpush1.msra.mxu0 0.0
  %538 = vmatprep.mubr.f32.mxu0 %v472
  %539 = vmatmul.mubr.f32.gmra.mrb[0].mxu0 %v441
  %v540 = vpop.f32.mrb[0].mxu0
  %v541 = vadd.f32 %v468, %v540
  %v542 = vpop.f32.mrb[0].mxu0
  %543 = vdwg.mxu0
  %545 = vrot.lane.b32.xlu0 %v541, 124
  %v546 = vpop.permute.xlu0 %545
  %v548 = vmin.f32 %v541, %v546
  %v549 = vmax.f32 %v541, %v546
  %550 = vrot.lane.b32.xlu0 %v541, 120
  %v551 = vpop.permute.xlu0 %550
  %v553 = vmin.f32 %v548, %v551
  %v554 = vmax.f32 %v549, %v551
  %555 = vrot.lane.b32.xlu0 %v541, 116
  %v556 = vpop.permute.xlu0 %555
  %v558 = vmin.f32 %v553, %v556
  %v559 = vmax.f32 %v554, %v556
  %560 = vrot.lane.b32.xlu0 %v541, 112
  %v561 = vpop.permute.xlu0 %560
  %v563 = vmin.f32 %v558, %v561
  %v564 = vmax.f32 %v559, %v561
  %v565 = vsub.f32 %v563, %v564
  %v566 = vstv %s30
  %v567 = vmul.f32 %v566, %v565
  %v568 = vadd.f32 %v564, %v567
  %vm569 = vcmask 31744
  %570 = vst.msk [vmem:[%s8] sm:$0xff] %vm569, %v568
  // Predicated region
  $region34: #{tpu_custom_call.1} parent=0 // pred_check
    _
  $region35: #{tpu_custom_call.1} parent=0 // pred_check_branch
    %572 = sbr.rel (0) target = $region37
  $region36: #{tpu_custom_call.1} parent=0 // pred_region
    _
  $region37: #{tpu_custom_call.1} parent=0 // pred_fallthru
    _
  // Predicated region
  $region38: #{tpu_custom_call.1} parent=0 // pred_check
    _
  $region39: #{tpu_custom_call.1} parent=0 // pred_check_branch
    %574 = sbr.rel (0) target = $region41
  $region40: #{tpu_custom_call.1} parent=0 // pred_region
    _
  $region41: #{tpu_custom_call.1} parent=0 // pred_fallthru
    _

</llo_original>
